<compile_context>
chip_gen: v6e
topology: v6e:2x2x1
jax: 0.10.0
libtpu: 0.0.40
codegen_flags: <defaults>
</compile_context>

<pallas_src>
import numpy as np
import jax
import jax.numpy as jnp
from jax.experimental import pallas as pl
from jax.experimental.pallas import tpu as pltpu

HIDDEN = 200        # logical hidden width: nn.Linear(model_in, 200)
HIDDEN_PAD = 256    # padded to a multiple of 128 (clean MXU K/N, no lane masks)
LANE = 128


def _round_up(x, m):
    return ((x + m - 1) // m) * m


# ----------------------------------------------------------------------------
# Pallas kernel: fused MLP (concat already done wrapper-side) + "mu += obs"
# postproc on one batch tile.  Weights/biases are whole-array VMEM residents.
# ----------------------------------------------------------------------------
def _mlp_kernel(x_ref,
                w1_ref, b1_ref,
                w2_ref, b2_ref,
                w3_ref, b3_ref,
                w4_ref, b4_ref,
                add_ref,
                out_ref):
    x = x_ref[...]                                           # bf16 [tb, IN_PAD]

    # Layer 1 (single K=IN_PAD matmul; concat fused wrapper-side).
    h = jnp.dot(x, w1_ref[...], preferred_element_type=jnp.float32) + b1_ref[...]
    h = jnp.maximum(h, 0.0).astype(jnp.bfloat16)
    # Layer 2
    h = jnp.dot(h, w2_ref[...], preferred_element_type=jnp.float32) + b2_ref[...]
    h = jnp.maximum(h, 0.0).astype(jnp.bfloat16)
    # Layer 3
    h = jnp.dot(h, w3_ref[...], preferred_element_type=jnp.float32) + b3_ref[...]
    h = jnp.maximum(h, 0.0).astype(jnp.bfloat16)
    # Layer 4 + fused postproc: add_ref is a 0/1 matrix adding obs onto the
    # mu columns of the raw network output (f32 accumulation).
    out = (jnp.dot(h, w4_ref[...], preferred_element_type=jnp.float32)
           + jnp.dot(x, add_ref[...], preferred_element_type=jnp.float32)
           + b4_ref[...])
    out_ref[...] = out.astype(out_ref.dtype)


def mlp_forward(x, padded_params, add_mat, d_out, *,
                max_block_b=1024, split_threshold=256):
    """x: [B, IN_PAD] bf16 (obs|lat|act concat).  Returns [B, d_out] f32."""
    (w1, b1, w2, b2, w3, b3, w4, b4) = padded_params
    B, in_pad = x.shape
    d_out_pad = w4.shape[1]
    hp = w2.shape[0]

    # Batch tile: whole batch in one step when small; for larger batches use
    # >=2 grid steps (v7x megacore sharding via "parallel") capped at
    # max_block_b rows.  Tiles are multiples of 16 (bf16 sublane packing).
    b_eff = max(B, 1)
    if b_eff <= split_threshold:
        block_b = _round_up(b_eff, 16)
    else:
        block_b = min(max_block_b, _round_up(-(-b_eff // 2), 16))
    b_pad = _round_up(b_eff, block_b)

    x_p = x if b_pad == B else jnp.pad(x, ((0, b_pad - B), (0, 0)))

    # Whole-array VMEM residents: copied once, not pipelined per grid step.
    resident = pl.BlockSpec(memory_space=pltpu.MemorySpace.VMEM)

    flops = 2 * b_pad * (in_pad * hp + 2 * hp * hp
                         + hp * d_out_pad + in_pad * d_out_pad)
    weight_bytes = sum(int(p.size) * p.dtype.itemsize for p in padded_params)
    weight_bytes += int(add_mat.size) * add_mat.dtype.itemsize
    bytes_accessed = (int(x_p.size) * x_p.dtype.itemsize
                      + b_pad * d_out_pad * 4 + weight_bytes)

    out_pad = pl.pallas_call(
        _mlp_kernel,
        out_shape=jax.ShapeDtypeStruct((b_pad, d_out_pad), jnp.float32),
        grid_spec=pltpu.PrefetchScalarGridSpec(
            num_scalar_prefetch=0,
            grid=(b_pad // block_b,),
            in_specs=[
                pl.BlockSpec((block_b, in_pad), lambda i: (i, 0)),   # x tile
                resident, resident,     # w1, b1
                resident, resident,     # w2, b2
                resident, resident,     # w3, b3
                resident, resident,     # w4, b4
                resident,               # add_mat
            ],
            out_specs=pl.BlockSpec((block_b, d_out_pad), lambda i: (i, 0)),
        ),
        compiler_params=pltpu.CompilerParams(
            dimension_semantics=("parallel",)),
        cost_estimate=pl.CostEstimate(
            flops=int(flops), transcendentals=0,
            bytes_accessed=int(bytes_accessed)),
    )(x_p, w1, b1, w2, b2, w3, b3, w4, b4, add_mat)

    return out_pad[:B, :d_out]


# ----------------------------------------------------------------------------
# LatentModel equivalent (parameters initialized deterministically in-script).
# ----------------------------------------------------------------------------
class LatentModelPallas:
    def __init__(self, key, *, obs_dim, act_dim, latent_dim, num_nets,
                 model_out, is_probabilistic=True, sigma=None,
                 deterministic_sigma_multiplier=1.0):
        self.obs_dim = obs_dim
        self.act_dim = act_dim
        self.latent_dim = latent_dim
        self.model_in = obs_dim + latent_dim + act_dim
        self.model_out = model_out
        self.num_nets = num_nets
        self.d_out = num_nets * model_out
        self.is_probabilistic = is_probabilistic
        self.deterministic_sigma_multiplier = float(deterministic_sigma_multiplier)
        assert self.deterministic_sigma_multiplier > 0
        # observation_names + action_names order used for concatenation
        self.input_keys = ["obs", "latent", "act"]

        def linear(k, fan_in, fan_out):
            # PyTorch nn.Linear default init: U(-1/sqrt(fan_in), 1/sqrt(fan_in))
            kw, kb = jax.random.split(k)
            bound = 1.0 / np.sqrt(fan_in)
            w = jax.random.uniform(kw, (fan_in, fan_out), jnp.float32, -bound, bound)
            b = jax.random.uniform(kb, (1, fan_out), jnp.float32, -bound, bound)
            return w, b

        k1, k2, k3, k4, k5 = jax.random.split(key, 5)
        self.w1, self.b1 = linear(k1, self.model_in, HIDDEN)
        self.w2, self.b2 = linear(k2, HIDDEN, HIDDEN)
        self.w3, self.b3 = linear(k3, HIDDEN, HIDDEN)
        self.w4, self.b4 = linear(k4, HIDDEN, self.d_out)

        # GaussianLatentObject parameters (learned latent mu / logsig).
        # TODO(synk): GaussianLatentObject source not provided; modeled as a
        # diagonal Gaussian with reparameterized sampling.
        self.latent_mu = jnp.zeros((latent_dim,), jnp.float32)
        self.latent_logsig = jax.random.normal(k5, (latent_dim,), jnp.float32) * 0.1

        if sigma is None:
            sig_dim = model_out // 2 if is_probabilistic else model_out
            sigma = np.full((sig_dim,), 0.1, dtype=np.float64)
        self.default_sigma_obs = jnp.asarray(sigma, jnp.float32)

        self._build_padded_params()

    # Zero-pad everything to lane-dense shapes; weights stored in bf16
    # (f32 accumulation happens in-kernel), biases kept f32.
    def _build_padded_params(self):
        hp = HIDDEN_PAD
        in_pad = _round_up(self.model_in, 8)
        d_out_pad = _round_up(self.d_out, LANE)

        def pad(a, rows, cols):
            return jnp.pad(a, ((0, rows - a.shape[0]), (0, cols - a.shape[1])))

        bf16 = jnp.bfloat16
        w1p = pad(self.w1, in_pad, hp).astype(bf16)     # stacked obs|lat|act rows
        b1p = pad(self.b1, 1, hp)                        # f32
        w2p = pad(self.w2, hp, hp).astype(bf16)
        b2p = pad(self.b2, 1, hp)
        w3p = pad(self.w3, hp, hp).astype(bf16)
        b3p = pad(self.b3, 1, hp)
        w4p = pad(self.w4, hp, d_out_pad).astype(bf16)
        b4p = pad(self.b4, 1, d_out_pad)

        # Residual matrix for the fused postproc: x @ A adds obs (the first
        # obs_dim columns of x) onto the mu columns of every net's output block.
        mu_dim = self.model_out // 2 if self.is_probabilistic else self.model_out
        assert mu_dim == self.obs_dim, "postproc adds obs to mu; dims must match"
        add = np.zeros((in_pad, d_out_pad), np.float32)
        for n in range(self.num_nets):
            base = n * self.model_out
            for i in range(self.obs_dim):
                add[i, base + i] = 1.0

        self._padded_params = (w1p, b1p, w2p, b2p, w3p, b3p, w4p, b4p)
        self._add_mat = jnp.asarray(add).astype(bf16)
        self._in_pad = in_pad
        self._d_out_pad = d_out_pad

    def _sample_latent(self, latent, rng):
        # dist = self._latent_obj(inputs); inputs['latent'] = dist['sample']
        # TODO(synk): uses only latent.shape; true GaussianLatentObject semantics unknown.
        eps = jax.random.normal(rng, latent.shape, jnp.float32)
        return self.latent_mu[None, :] + jnp.exp(self.latent_logsig)[None, :] * eps

    def _forward(self, inputs, use_pallas=True):
        obs = inputs["obs"].reshape(inputs["obs"].shape[0], -1).astype(jnp.float32)
        lat = inputs["latent"].reshape(inputs["latent"].shape[0], -1).astype(jnp.float32)
        act = inputs["act"].reshape(inputs["act"].shape[0], -1).astype(jnp.float32)
        B = obs.shape[0]

        if use_pallas:
            # one [B, model_in] concat in the wrapper; kernel fuses the whole
            # 4-layer MLP + "mu += obs" postproc.
            x = jnp.concatenate([obs, lat, act], axis=1)
            if self._in_pad != x.shape[1]:
                x = jnp.pad(x, ((0, 0), (0, self._in_pad - x.shape[1])))
            x = x.astype(jnp.bfloat16)
            raw = mlp_forward(x, self._padded_params, self._add_mat, self.d_out)
            out = raw.reshape(B, self.num_nets, -1)
            if self.is_probabilistic:
                mu, sigma = jnp.split(out, 2, axis=2)
            else:
                mu = out
                sigma = jnp.ones_like(mu) * (self.default_sigma_obs *
                                             self.deterministic_sigma_multiplier)
            return {"next_obs": mu, "next_obs_sigma": sigma}

        # pure-JAX reference path (unpadded f32 weights, original op order)
        x = jnp.concatenate([obs, lat, act], axis=1)          # [B, model_in]
        h = x
        for (w, b) in ((self.w1, self.b1), (self.w2, self.b2), (self.w3, self.b3)):
            h = jnp.maximum(h @ w + b, 0.0)
        raw = h @ self.w4 + self.b4
        out = raw.reshape(B, self.num_nets, -1)
        if self.is_probabilistic:
            mu, sigma = jnp.split(out, 2, axis=2)
        else:
            mu = out
            sigma = jnp.ones_like(mu) * (self.default_sigma_obs *
                                         self.deterministic_sigma_multiplier)
        mu = mu + obs[:, None, :]                             # postproc_fn
        return {"next_obs": mu, "next_obs_sigma": sigma}

    def forward(self, inputs, rng, use_pallas=True):
        inputs = dict(inputs)
        if inputs["latent"].shape[0] > 0:
            inputs["latent"] = self._sample_latent(inputs["latent"], rng)
        return self._forward(inputs, use_pallas=use_pallas)


# ----------------------------------------------------------------------------
if __name__ == "__main__":
    key = jax.random.PRNGKey(0)
    k_param, k_obs, k_act, k_lat, k_samp = jax.random.split(key, 5)

    # Small shapes implied by the module's forward:
    B, obs_dim, act_dim, latent_dim = 16, 8, 4, 4
    num_nets = 2
    model_out = 2 * obs_dim  # probabilistic: chunks into (mu, sigma), each obs_dim

    model = LatentModelPallas(
        k_param,
        obs_dim=obs_dim, act_dim=act_dim, latent_dim=latent_dim,
        num_nets=num_nets, model_out=model_out,
        is_probabilistic=True,
        deterministic_sigma_multiplier=1.0,
    )

    inputs = {
        "obs": jax.random.normal(k_obs, (B, obs_dim), jnp.float32),
        "act": jax.random.normal(k_act, (B, act_dim), jnp.float32),
        "latent": jax.random.normal(k_lat, (B, latent_dim), jnp.float32),
    }

    out = model.forward(inputs, k_samp, use_pallas=True)
    jax.block_until_ready(out)

    # Cross-check the fused bf16 Pallas path against the pure-JAX f32 reference.
    ref = model.forward(inputs, k_samp, use_pallas=False)
    assert out["next_obs"].shape == (B, num_nets, obs_dim)
    assert out["next_obs_sigma"].shape == (B, num_nets, obs_dim)
    np.testing.assert_allclose(np.asarray(out["next_obs"]),
                               np.asarray(ref["next_obs"]), rtol=5e-2, atol=5e-2)
    np.testing.assert_allclose(np.asarray(out["next_obs_sigma"]),
                               np.asarray(ref["next_obs_sigma"]), rtol=5e-2, atol=5e-2)

    print("KERNEL_OK")
</pallas_src>

<mosaic_0001>
module attributes {stable_mosaic.version = 11 : i64} {
  func.func @_mlp_kernel(%arg0: i32, %arg1: memref<16x16xbf16, #tpu.memory_space<vmem>>, %arg2: memref<16x256xbf16, #tpu.memory_space<vmem>>, %arg3: memref<1x256xf32, #tpu.memory_space<vmem>>, %arg4: memref<256x256xbf16, #tpu.memory_space<vmem>>, %arg5: memref<1x256xf32, #tpu.memory_space<vmem>>, %arg6: memref<256x256xbf16, #tpu.memory_space<vmem>>, %arg7: memref<1x256xf32, #tpu.memory_space<vmem>>, %arg8: memref<256x128xbf16, #tpu.memory_space<vmem>>, %arg9: memref<1x128xf32, #tpu.memory_space<vmem>>, %arg10: memref<16x128xbf16, #tpu.memory_space<vmem>>, %arg11: memref<16x128xf32, #tpu.memory_space<vmem>>) attributes {dimension_semantics = [#tpu.dimension_semantics<parallel>], iteration_bounds = array<i64: 1>, scalar_prefetch = 0 : i64, scratch_operands = 0 : i64, tpu.core_type = #tpu.core_type<tc>, window_params = [{transform_indices = @transform_0, window_bounds = array<i64: 16, 16>}, {pipeline_mode = #tpu.pipeline_mode<synchronous>, transform_indices = @transform_1, window_bounds = array<i64: 16, 256>}, {pipeline_mode = #tpu.pipeline_mode<synchronous>, transform_indices = @transform_2, window_bounds = array<i64: 1, 256>}, {pipeline_mode = #tpu.pipeline_mode<synchronous>, transform_indices = @transform_3, window_bounds = array<i64: 256, 256>}, {pipeline_mode = #tpu.pipeline_mode<synchronous>, transform_indices = @transform_4, window_bounds = array<i64: 1, 256>}, {pipeline_mode = #tpu.pipeline_mode<synchronous>, transform_indices = @transform_5, window_bounds = array<i64: 256, 256>}, {pipeline_mode = #tpu.pipeline_mode<synchronous>, transform_indices = @transform_6, window_bounds = array<i64: 1, 256>}, {pipeline_mode = #tpu.pipeline_mode<synchronous>, transform_indices = @transform_7, window_bounds = array<i64: 256, 128>}, {pipeline_mode = #tpu.pipeline_mode<synchronous>, transform_indices = @transform_8, window_bounds = array<i64: 1, 128>}, {pipeline_mode = #tpu.pipeline_mode<synchronous>, transform_indices = @transform_9, window_bounds = array<i64: 16, 128>}, {transform_indices = @transform_10, window_bounds = array<i64: 16, 128>}]} {
    %c0 = arith.constant 0 : index
    %c0_0 = arith.constant 0 : index
    %0 = vector.load %arg1[%c0, %c0_0] : memref<16x16xbf16, #tpu.memory_space<vmem>>, vector<16x16xbf16>
    %c0_1 = arith.constant 0 : index
    %c0_2 = arith.constant 0 : index
    %1 = vector.load %arg2[%c0_1, %c0_2] : memref<16x256xbf16, #tpu.memory_space<vmem>>, vector<16x256xbf16>
    %cst = arith.constant dense<0.000000e+00> : vector<16x256xf32>
    %2 = tpu.matmul %0, %1, %cst {dimension_numbers = #tpu.dot_dimension_numbers<[1], [0], [0], [1], [0, 0, 1, 1], [], []>} : vector<16x16xbf16>, vector<16x256xbf16>, vector<16x256xf32> -> vector<16x256xf32>
    %c0_3 = arith.constant 0 : index
    %c0_4 = arith.constant 0 : index
    %3 = vector.load %arg3[%c0_3, %c0_4] : memref<1x256xf32, #tpu.memory_space<vmem>>, vector<1x256xf32>
    %4 = vector.broadcast %3 : vector<1x256xf32> to vector<16x256xf32>
    %5 = arith.addf %2, %4 : vector<16x256xf32>
    %cst_5 = arith.constant 0.000000e+00 : f32
    %6 = vector.broadcast %cst_5 : f32 to vector<16x256xf32>
    %7 = arith.maximumf %5, %6 : vector<16x256xf32>
    %8 = arith.truncf %7 : vector<16x256xf32> to vector<16x256xbf16>
    %c0_6 = arith.constant 0 : index
    %c0_7 = arith.constant 0 : index
    %9 = vector.load %arg4[%c0_6, %c0_7] : memref<256x256xbf16, #tpu.memory_space<vmem>>, vector<256x256xbf16>
    %cst_8 = arith.constant dense<0.000000e+00> : vector<16x256xf32>
    %10 = tpu.matmul %8, %9, %cst_8 {dimension_numbers = #tpu.dot_dimension_numbers<[1], [0], [0], [1], [0, 0, 1, 1], [], []>} : vector<16x256xbf16>, vector<256x256xbf16>, vector<16x256xf32> -> vector<16x256xf32>
    %c0_9 = arith.constant 0 : index
    %c0_10 = arith.constant 0 : index
    %11 = vector.load %arg5[%c0_9, %c0_10] : memref<1x256xf32, #tpu.memory_space<vmem>>, vector<1x256xf32>
    %12 = vector.broadcast %11 : vector<1x256xf32> to vector<16x256xf32>
    %13 = arith.addf %10, %12 : vector<16x256xf32>
    %cst_11 = arith.constant 0.000000e+00 : f32
    %14 = vector.broadcast %cst_11 : f32 to vector<16x256xf32>
    %15 = arith.maximumf %13, %14 : vector<16x256xf32>
    %16 = arith.truncf %15 : vector<16x256xf32> to vector<16x256xbf16>
    %c0_12 = arith.constant 0 : index
    %c0_13 = arith.constant 0 : index
    %17 = vector.load %arg6[%c0_12, %c0_13] : memref<256x256xbf16, #tpu.memory_space<vmem>>, vector<256x256xbf16>
    %cst_14 = arith.constant dense<0.000000e+00> : vector<16x256xf32>
    %18 = tpu.matmul %16, %17, %cst_14 {dimension_numbers = #tpu.dot_dimension_numbers<[1], [0], [0], [1], [0, 0, 1, 1], [], []>} : vector<16x256xbf16>, vector<256x256xbf16>, vector<16x256xf32> -> vector<16x256xf32>
    %c0_15 = arith.constant 0 : index
    %c0_16 = arith.constant 0 : index
    %19 = vector.load %arg7[%c0_15, %c0_16] : memref<1x256xf32, #tpu.memory_space<vmem>>, vector<1x256xf32>
    %20 = vector.broadcast %19 : vector<1x256xf32> to vector<16x256xf32>
    %21 = arith.addf %18, %20 : vector<16x256xf32>
    %cst_17 = arith.constant 0.000000e+00 : f32
    %22 = vector.broadcast %cst_17 : f32 to vector<16x256xf32>
    %23 = arith.maximumf %21, %22 : vector<16x256xf32>
    %24 = arith.truncf %23 : vector<16x256xf32> to vector<16x256xbf16>
    %c0_18 = arith.constant 0 : index
    %c0_19 = arith.constant 0 : index
    %25 = vector.load %arg8[%c0_18, %c0_19] : memref<256x128xbf16, #tpu.memory_space<vmem>>, vector<256x128xbf16>
    %cst_20 = arith.constant dense<0.000000e+00> : vector<16x128xf32>
    %26 = tpu.matmul %24, %25, %cst_20 {dimension_numbers = #tpu.dot_dimension_numbers<[1], [0], [0], [1], [0, 0, 1, 1], [], []>} : vector<16x256xbf16>, vector<256x128xbf16>, vector<16x128xf32> -> vector<16x128xf32>
    %c0_21 = arith.constant 0 : index
    %c0_22 = arith.constant 0 : index
    %27 = vector.load %arg10[%c0_21, %c0_22] : memref<16x128xbf16, #tpu.memory_space<vmem>>, vector<16x128xbf16>
    %cst_23 = arith.constant dense<0.000000e+00> : vector<16x128xf32>
    %28 = tpu.matmul %0, %27, %cst_23 {dimension_numbers = #tpu.dot_dimension_numbers<[1], [0], [0], [1], [0, 0, 1, 1], [], []>} : vector<16x16xbf16>, vector<16x128xbf16>, vector<16x128xf32> -> vector<16x128xf32>
    %29 = arith.addf %26, %28 : vector<16x128xf32>
    %c0_24 = arith.constant 0 : index
    %c0_25 = arith.constant 0 : index
    %30 = vector.load %arg9[%c0_24, %c0_25] : memref<1x128xf32, #tpu.memory_space<vmem>>, vector<1x128xf32>
    %31 = vector.broadcast %30 : vector<1x128xf32> to vector<16x128xf32>
    %32 = arith.addf %29, %31 : vector<16x128xf32>
    %c0_26 = arith.constant 0 : index
    %c0_27 = arith.constant 0 : index
    %33 = vector.load %arg11[%c0_26, %c0_27] : memref<16x128xf32, #tpu.memory_space<vmem>>, vector<16x128xf32>
    tpu.vector_store %arg11[%c0_26, %c0_27], %32 {strides = array<i32>} : memref<16x128xf32, #tpu.memory_space<vmem>>, vector<16x128xf32>,
    return
  }
  func.func @transform_0(%arg0: i32) -> (i32, i32) {
    %c0_i32 = arith.constant 0 : i32
    %c0_i32_0 = arith.constant 0 : i32
    return %arg0, %c0_i32 : i32, i32
  }
  func.func @transform_1(%arg0: i32) -> (i32, i32) {
    %c0_i32 = arith.constant 0 : i32
    %c0_i32_0 = arith.constant 0 : i32
    %c0_i32_1 = arith.constant 0 : i32
    return %c0_i32, %c0_i32_0 : i32, i32
  }
  func.func @transform_2(%arg0: i32) -> (i32, i32) {
    %c0_i32 = arith.constant 0 : i32
    %c0_i32_0 = arith.constant 0 : i32
    %c0_i32_1 = arith.constant 0 : i32
    return %c0_i32, %c0_i32_0 : i32, i32
  }
  func.func @transform_3(%arg0: i32) -> (i32, i32) {
    %c0_i32 = arith.constant 0 : i32
    %c0_i32_0 = arith.constant 0 : i32
    %c0_i32_1 = arith.constant 0 : i32
    return %c0_i32, %c0_i32_0 : i32, i32
  }
  func.func @transform_4(%arg0: i32) -> (i32, i32) {
    %c0_i32 = arith.constant 0 : i32
    %c0_i32_0 = arith.constant 0 : i32
    %c0_i32_1 = arith.constant 0 : i32
    return %c0_i32, %c0_i32_0 : i32, i32
  }
  func.func @transform_5(%arg0: i32) -> (i32, i32) {
    %c0_i32 = arith.constant 0 : i32
    %c0_i32_0 = arith.constant 0 : i32
    %c0_i32_1 = arith.constant 0 : i32
    return %c0_i32, %c0_i32_0 : i32, i32
  }
  func.func @transform_6(%arg0: i32) -> (i32, i32) {
    %c0_i32 = arith.constant 0 : i32
    %c0_i32_0 = arith.constant 0 : i32
    %c0_i32_1 = arith.constant 0 : i32
    return %c0_i32, %c0_i32_0 : i32, i32
  }
  func.func @transform_7(%arg0: i32) -> (i32, i32) {
    %c0_i32 = arith.constant 0 : i32
    %c0_i32_0 = arith.constant 0 : i32
    %c0_i32_1 = arith.constant 0 : i32
    return %c0_i32, %c0_i32_0 : i32, i32
  }
  func.func @transform_8(%arg0: i32) -> (i32, i32) {
    %c0_i32 = arith.constant 0 : i32
    %c0_i32_0 = arith.constant 0 : i32
    %c0_i32_1 = arith.constant 0 : i32
    return %c0_i32, %c0_i32_0 : i32, i32
  }
  func.func @transform_9(%arg0: i32) -> (i32, i32) {
    %c0_i32 = arith.constant 0 : i32
    %c0_i32_0 = arith.constant 0 : i32
    %c0_i32_1 = arith.constant 0 : i32
    return %c0_i32, %c0_i32_0 : i32, i32
  }
  func.func @transform_10(%arg0: i32) -> (i32, i32) {
    %c0_i32 = arith.constant 0 : i32
    %c0_i32_0 = arith.constant 0 : i32
    return %arg0, %c0_i32 : i32, i32
  }
}

</mosaic_0001>

<llo_original>
// kernel: tpu_custom_call.1
$region0: #{tpu_custom_call.1}
  #allocation0 [shape = 'u32[]', space=smem, size = 0x4, offset = 0x4, fixed_abs, tag = 'smem constant byte address 0x4 - core index']
  #allocation1 [shape = 'u32[144,128]{1,0:T(1,128)}', space=vmem, size = 0x12000, scoped, tag = 'internal scratch']
  %s0 = inlined_call_operand.hbm [shape: bf16[16,16], index: 0, kind: input, shape index: {}]
  %s1 = inlined_call_operand.hbm [shape: bf16[16,256], index: 1, kind: input, shape index: {}]
  %s2 = inlined_call_operand.vmem [shape: f32[1,256], index: 2, kind: input, shape index: {}]
  %s3 = inlined_call_operand.hbm [shape: bf16[256,256], index: 3, kind: input, shape index: {}]
  %s4 = inlined_call_operand.vmem [shape: f32[1,256], index: 4, kind: input, shape index: {}]
  %s5 = inlined_call_operand.hbm [shape: bf16[256,256], index: 5, kind: input, shape index: {}]
  %s6 = inlined_call_operand.vmem [shape: f32[1,256], index: 6, kind: input, shape index: {}]
  %s7 = inlined_call_operand.hbm [shape: bf16[256,128], index: 7, kind: input, shape index: {}]
  %s8 = inlined_call_operand.vmem [shape: f32[1,128], index: 8, kind: input, shape index: {}]
  %s9 = inlined_call_operand.vmem [shape: bf16[16,128], index: 9, kind: input, shape index: {}]
  %s10 = inlined_call_operand.hbm [shape: f32[16,128], index: 10, kind: output, shape index: {}]
  %s11 = sld [smem:[#allocation0]]
  $region70: #{tpu_custom_call.1} parent=0
    _
  %s13 = ssub.s32 1, %s11
  %s14 = scalar_select 0, %s13, %s11
  $region1: #{tpu_custom_call.1} parent=0
    #allocation2 [shape = 'u8[4096]{0}', space=vmem, size = 0x1000, scoped, tag = 'input window, operand 0, single buffered']
    #allocation3 [shape = 's32[1]{0}', space=sflag, size = 0x4, scoped, tag = 'scoped memory for tpu_custom_call.1']
    #allocation4 [shape = 's32[1]{0}', space=sflag, size = 0x4, scoped, tag = 'scoped memory for tpu_custom_call.1']
    #allocation5 [shape = 'u8[8192]{0}', space=vmem, size = 0x2000, scoped, tag = 'input window, operand 1, single buffered']
    #allocation6 [shape = 's32[1]{0}', space=sflag, size = 0x4, scoped, tag = 'scoped memory for tpu_custom_call.1']
    #allocation7 [shape = 'u8[131072]{0}', space=vmem, size = 0x20000, scoped, tag = 'input window, operand 3, single buffered']
    #allocation8 [shape = 'u8[131072]{0}', space=vmem, size = 0x20000, scoped, tag = 'input window, operand 5, single buffered']
    #allocation9 [shape = 's32[1]{0}', space=sflag, size = 0x4, scoped, tag = 'scoped memory for tpu_custom_call.1']
    #allocation10 [shape = 'u8[65536]{0}', space=vmem, size = 0x10000, scoped, tag = 'input window, operand 7, single buffered']
    #allocation11 [shape = 'u8[8192]{0}', space=vmem, size = 0x2000, scoped, tag = 'output window, operand 0, single buffered']
    %15 = vsyncpa [#allocation3], 0
    %16 = vsyncpa [#allocation6], 0
    %17 = vsyncpa [#allocation9], 0
    %18 = vsyncpa [#allocation4], 0
    // Predicated region
    $region2: #{tpu_custom_call.1} parent=1 // pred_check
      _
    $region3: #{tpu_custom_call.1} parent=1 // pred_check_branch
      %20 = sbr.rel (0) target = $region5
    $region4: #{tpu_custom_call.1} parent=1 // pred_region
      %s22 = ssub.s32 128, 128
      %23 = vsyncadd [#allocation3], %s22
      %s24 = sshll.u32 [#allocation2], 4
      %s25 = int_to_ptr.vmem [resolvable:$true] %s24
      %30 = dma.hbm_to_vmem [thread:$0]  %s0, 128, %s25, [#allocation3], 64, 64, 4
    $region5: #{tpu_custom_call.1} parent=1 // pred_fallthru
      _
    // Predicated region
    $region6: #{tpu_custom_call.1} parent=1 // pred_check
      _
    $region7: #{tpu_custom_call.1} parent=1 // pred_check_branch
      %32 = sbr.rel (0) target = $region9
    $region8: #{tpu_custom_call.1} parent=1 // pred_region
      %s34 = ssub.s32 256, 256
      %35 = vsyncadd [#allocation6], %s34
      %s36 = sshll.u32 [#allocation5], 4
      %s37 = int_to_ptr.vmem [resolvable:$true] %s36
      %42 = dma.hbm_to_vmem [thread:$0]  %s1, 256, %s37, [#allocation6], 128, 128, 8
    $region9: #{tpu_custom_call.1} parent=1 // pred_fallthru
      _
    // Predicated region
    $region10: #{tpu_custom_call.1} parent=1 // pred_check
      _
    $region11: #{tpu_custom_call.1} parent=1 // pred_check_branch
      %44 = sbr.rel (0) target = $region13
    $region12: #{tpu_custom_call.1} parent=1 // pred_region
      _
    $region13: #{tpu_custom_call.1} parent=1 // pred_fallthru
      _
    // Predicated region
    $region14: #{tpu_custom_call.1} parent=1 // pred_check
      _
    $region15: #{tpu_custom_call.1} parent=1 // pred_check_branch
      %46 = sbr.rel (0) target = $region17
    $region16: #{tpu_custom_call.1} parent=1 // pred_region
      %s48 = ssub.s32 4096, 4096
      %49 = vsyncadd [#allocation6], %s48
      %s50 = sshll.u32 [#allocation7], 4
      %s51 = int_to_ptr.vmem [resolvable:$true] %s50
      %56 = dma.hbm_to_vmem [thread:$0]  %s3, 4096, %s51, [#allocation6], 128, 128, 8
    $region17: #{tpu_custom_call.1} parent=1 // pred_fallthru
      _
    // Predicated region
    $region18: #{tpu_custom_call.1} parent=1 // pred_check
      _
    $region19: #{tpu_custom_call.1} parent=1 // pred_check_branch
      %58 = sbr.rel (0) target = $region21
    $region20: #{tpu_custom_call.1} parent=1 // pred_region
      _
    $region21: #{tpu_custom_call.1} parent=1 // pred_fallthru
      _
    // Predicated region
    $region22: #{tpu_custom_call.1} parent=1 // pred_check
      _
    $region23: #{tpu_custom_call.1} parent=1 // pred_check_branch
      %60 = sbr.rel (0) target = $region25
    $region24: #{tpu_custom_call.1} parent=1 // pred_region
      %s62 = ssub.s32 4096, 4096
      %63 = vsyncadd [#allocation9], %s62
      %s64 = sshll.u32 [#allocation8], 4
      %s65 = int_to_ptr.vmem [resolvable:$true] %s64
      %70 = dma.hbm_to_vmem [thread:$0]  %s5, 4096, %s65, [#allocation9], 128, 128, 8
    $region25: #{tpu_custom_call.1} parent=1 // pred_fallthru
      _
    // Predicated region
    $region26: #{tpu_custom_call.1} parent=1 // pred_check
      _
    $region27: #{tpu_custom_call.1} parent=1 // pred_check_branch
      %72 = sbr.rel (0) target = $region29
    $region28: #{tpu_custom_call.1} parent=1 // pred_region
      _
    $region29: #{tpu_custom_call.1} parent=1 // pred_fallthru
      _
    // Predicated region
    $region30: #{tpu_custom_call.1} parent=1 // pred_check
      _
    $region31: #{tpu_custom_call.1} parent=1 // pred_check_branch
      %74 = sbr.rel (0) target = $region33
    $region32: #{tpu_custom_call.1} parent=1 // pred_region
      %s76 = ssub.s32 2048, 2048
      %77 = vsyncadd [#allocation9], %s76
      %s78 = sshll.u32 [#allocation10], 4
      %s79 = int_to_ptr.vmem [resolvable:$true] %s78
      %84 = dma.hbm_to_vmem [thread:$0]  %s7, 2048, %s79, [#allocation9], 64, 64, 4
    $region33: #{tpu_custom_call.1} parent=1 // pred_fallthru
      _
    // Predicated region
    $region34: #{tpu_custom_call.1} parent=1 // pred_check
      _
    $region35: #{tpu_custom_call.1} parent=1 // pred_check_branch
      %86 = sbr.rel (0) target = $region37
    $region36: #{tpu_custom_call.1} parent=1 // pred_region
      _
    $region37: #{tpu_custom_call.1} parent=1 // pred_fallthru
      _
    // Predicated region
    $region38: #{tpu_custom_call.1} parent=1 // pred_check
      _
    $region39: #{tpu_custom_call.1} parent=1 // pred_check_branch
      %88 = sbr.rel (0) target = $region41
    $region40: #{tpu_custom_call.1} parent=1 // pred_region
      _
    $region41: #{tpu_custom_call.1} parent=1 // pred_fallthru
      _
    // Predicated region
    $region42: #{tpu_custom_call.1} parent=1 // pred_check
      _
    $region43: #{tpu_custom_call.1} parent=1 // pred_check_branch
      %90 = sbr.rel (0) target = $region45
    $region44: #{tpu_custom_call.1} parent=1 // pred_region
      %91 = dma.done [#allocation3], 128
    $region45: #{tpu_custom_call.1} parent=1 // pred_fallthru
      _
    // Predicated region
    $region46: #{tpu_custom_call.1} parent=1 // pred_check
      _
    $region47: #{tpu_custom_call.1} parent=1 // pred_check_branch
      %93 = sbr.rel (0) target = $region49
    $region48: #{tpu_custom_call.1} parent=1 // pred_region
      %94 = dma.done [#allocation6], 256
    $region49: #{tpu_custom_call.1} parent=1 // pred_fallthru
      _
    // Predicated region
    $region50: #{tpu_custom_call.1} parent=1 // pred_check
      _
    $region51: #{tpu_custom_call.1} parent=1 // pred_check_branch
      %96 = sbr.rel (0) target = $region53
    $region52: #{tpu_custom_call.1} parent=1 // pred_region
      %97 = dma.done [#allocation6], 4096
    $region53: #{tpu_custom_call.1} parent=1 // pred_fallthru
      _
    // Predicated region
    $region54: #{tpu_custom_call.1} parent=1 // pred_check
      _
    $region55: #{tpu_custom_call.1} parent=1 // pred_check_branch
      %99 = sbr.rel (0) target = $region57
    $region56: #{tpu_custom_call.1} parent=1 // pred_region
      %100 = dma.done [#allocation9], 4096
    $region57: #{tpu_custom_call.1} parent=1 // pred_fallthru
      _
    // Predicated region
    $region58: #{tpu_custom_call.1} parent=1 // pred_check
      _
    $region59: #{tpu_custom_call.1} parent=1 // pred_check_branch
      %102 = sbr.rel (0) target = $region61
    $region60: #{tpu_custom_call.1} parent=1 // pred_region
      %103 = dma.done [#allocation9], 2048
    $region61: #{tpu_custom_call.1} parent=1 // pred_fallthru
      _
    %v105 = vld [vmem:[#allocation2] sm:$0xf]
    %v106 = vld [vmem:[#allocation2 + $0x4] sm:$0xf]
    %v107 = vld [vmem:[#allocation5] sm:$0xff]
    %v108 = vld [vmem:[#allocation5 + $0x8] sm:$0xff]
    %v109 = vld [vmem:[%s2] sm:$0x3]
    %v111 = vlaneseq
    %v112 = vshrl.u32 %v111, 7
    %v113 = vsub.s32 0, %v112
    %v114 = vrot.slane %v109, %v113
    %v115 = vlaneseq
    %v116 = vshrl.u32 %v115, 7
    %v117 = vsub.s32 1, %v116
    %v118 = vrot.slane %v109, %v117
    %v123 = vunpack.c.l.b16 %v105
    %v124 = vunpack.c.l.b16 %v106
    %v125 = vpack.c.b16 %v124, %v123
    %v128 = vunpack.c.l.b16 %v107
    %v129 = vunpack.c.h.b16 %v107
    %v130 = vunpack.c.l.b16 %v108
    %v131 = vunpack.c.h.b16 %v108
    %v132 = vpack.c.b16 %v130, %v128
    %v133 = vpack.c.b16 %v131, %v129
    %vm136 = vcmask 130048
    %v138 = vsel %vm136, %v125, 0
    %140 = vmatprep.subr.bf16.mxu0 0
    %141 = vmatpush1.bf16.msra.mxu0 0
    %142 = vmatprep.subr.bf16.mxu0 0
    %143 = vmatpush1.bf16.msra.mxu0 0
    %144 = vmatprep.subr.bf16.mxu0 0
    %145 = vmatpush1.bf16.msra.mxu0 0
    %146 = vmatprep.subr.bf16.mxu0 0
    %147 = vmatpush1.bf16.msra.mxu0 0
    %148 = vmatprep.subr.bf16.mxu0 0
    %149 = vmatpush1.bf16.msra.mxu0 0
    %150 = vmatprep.subr.bf16.mxu0 0
    %151 = vmatpush1.bf16.msra.mxu0 0
    %152 = vmatprep.subr.bf16.mxu0 0
    %153 = vmatpush1.bf16.msra.mxu0 0
    %154 = vmatprep.subr.bf16.mxu0 %v133
    %155 = vmatpush1.bf16.msra.mxu0 %v132
    %156 = vmatprep.subr.bf16.mxu0 0
    %157 = vmatpush2.bf16.msra.mxu0 0
    %158 = vmatprep.subr.bf16.mxu0 0
    %159 = vmatpush2.bf16.msra.mxu0 0
    %160 = vmatprep.subr.bf16.mxu0 0
    %161 = vmatpush2.bf16.msra.mxu0 0
    %162 = vmatprep.subr.bf16.mxu0 0
    %163 = vmatpush2.bf16.msra.mxu0 0
    %164 = vmatprep.subr.bf16.mxu0 0
    %165 = vmatpush2.bf16.msra.mxu0 0
    %166 = vmatprep.subr.bf16.mxu0 0
    %167 = vmatpush2.bf16.msra.mxu0 0
    %168 = vmatprep.subr.bf16.mxu0 0
    %169 = vmatpush2.bf16.msra.mxu0 0
    %170 = vmatprep.subr.bf16.mxu0 0
    %171 = vmatpush2.bf16.msra.mxu0 0
    %172 = vmatprep.mubr.bf16.mxu0 0
    %173 = vmatmul.mubr.bf16.gmra.mxu0 %v138
    %v174 = vpop.f32.mrf.mxu0
    %v175 = vadd.f32 %v114, %v174
    %v176 = vpop.f32.mrf.mxu0
    %v177 = vadd.f32 %v118, %v176
    %v178 = vpop.f32.mrf.mxu0
    %v179 = vadd.f32 %v114, %v178
    %v180 = vpop.f32.mrf.mxu0
    %v181 = vadd.f32 %v118, %v180
    %182 = vdwg.mxu0
    %v183 = vmax.f32 %v175, 0.0
    %v184 = vmax.f32 %v177, 0.0
    %v185 = vmax.f32 %v179, 0.0
    %v186 = vmax.f32 %v181, 0.0
    %v187 = vpack.c.bf16 %v185, %v183
    %v188 = vpack.c.bf16 %v186, %v184
    %v189 = vld [vmem:[#allocation7] sm:$0xff]
    %v190 = vld [vmem:[#allocation7 + $0x8] sm:$0xff]
    %v191 = vld [vmem:[#allocation7 + $0x10] sm:$0xff]
    %v192 = vld [vmem:[#allocation7 + $0x18] sm:$0xff]
    %v193 = vld [vmem:[#allocation7 + $0x20] sm:$0xff]
    %v194 = vld [vmem:[#allocation7 + $0x28] sm:$0xff]
    %v195 = vld [vmem:[#allocation7 + $0x30] sm:$0xff]
    %v196 = vld [vmem:[#allocation7 + $0x38] sm:$0xff]
    %v197 = vld [vmem:[#allocation7 + $0x40] sm:$0xff]
    %v198 = vld [vmem:[#allocation7 + $0x48] sm:$0xff]
    %v199 = vld [vmem:[#allocation7 + $0x50] sm:$0xff]
    %v200 = vld [vmem:[#allocation7 + $0x58] sm:$0xff]
    %v201 = vld [vmem:[#allocation7 + $0x60] sm:$0xff]
    %v202 = vld [vmem:[#allocation7 + $0x68] sm:$0xff]
    %v203 = vld [vmem:[#allocation7 + $0x70] sm:$0xff]
    %v204 = vld [vmem:[#allocation7 + $0x78] sm:$0xff]
    %v205 = vld [vmem:[#allocation7 + $0x80] sm:$0xff]
    %v206 = vld [vmem:[#allocation7 + $0x88] sm:$0xff]
    %v207 = vld [vmem:[#allocation7 + $0x90] sm:$0xff]
    %v208 = vld [vmem:[#allocation7 + $0x98] sm:$0xff]
    %v209 = vld [vmem:[#allocation7 + $0xa0] sm:$0xff]
    %v210 = vld [vmem:[#allocation7 + $0xa8] sm:$0xff]
    %v211 = vld [vmem:[#allocation7 + $0xb0] sm:$0xff]
    %v212 = vld [vmem:[#allocation7 + $0xb8] sm:$0xff]
    %v213 = vld [vmem:[#allocation7 + $0xc0] sm:$0xff]
    %v214 = vld [vmem:[#allocation7 + $0xc8] sm:$0xff]
    %v215 = vld [vmem:[#allocation7 + $0xd0] sm:$0xff]
    %v216 = vld [vmem:[#allocation7 + $0xd8] sm:$0xff]
    %v217 = vld [vmem:[#allocation7 + $0xe0] sm:$0xff]
    %v218 = vld [vmem:[#allocation7 + $0xe8] sm:$0xff]
    %v219 = vld [vmem:[#allocation7 + $0xf0] sm:$0xff]
    %v220 = vld [vmem:[#allocation7 + $0xf8] sm:$0xff]
    %v221 = vld [vmem:[%s4] sm:$0x3]
    %v223 = vlaneseq
    %v224 = vshrl.u32 %v223, 7
    %v225 = vsub.s32 0, %v224
    %v226 = vrot.slane %v221, %v225
    %v227 = vlaneseq
    %v228 = vshrl.u32 %v227, 7
    %v229 = vsub.s32 1, %v228
    %v230 = vrot.slane %v221, %v229
    %v265 = vunpack.c.l.b16 %v189
    %v266 = vunpack.c.h.b16 %v189
    %v267 = vunpack.c.l.b16 %v190
    %v268 = vunpack.c.h.b16 %v190
    %v269 = vunpack.c.l.b16 %v191
    %v270 = vunpack.c.h.b16 %v191
    %v271 = vunpack.c.l.b16 %v192
    %v272 = vunpack.c.h.b16 %v192
    %v273 = vunpack.c.l.b16 %v193
    %v274 = vunpack.c.h.b16 %v193
    %v275 = vunpack.c.l.b16 %v194
    %v276 = vunpack.c.h.b16 %v194
    %v277 = vunpack.c.l.b16 %v195
    %v278 = vunpack.c.h.b16 %v195
    %v279 = vunpack.c.l.b16 %v196
    %v280 = vunpack.c.h.b16 %v196
    %v281 = vunpack.c.l.b16 %v197
    %v282 = vunpack.c.h.b16 %v197
    %v283 = vunpack.c.l.b16 %v198
    %v284 = vunpack.c.h.b16 %v198
    %v285 = vunpack.c.l.b16 %v199
    %v286 = vunpack.c.h.b16 %v199
    %v287 = vunpack.c.l.b16 %v200
    %v288 = vunpack.c.h.b16 %v200
    %v289 = vunpack.c.l.b16 %v201
    %v290 = vunpack.c.h.b16 %v201
    %v291 = vunpack.c.l.b16 %v202
    %v292 = vunpack.c.h.b16 %v202
    %v293 = vunpack.c.l.b16 %v203
    %v294 = vunpack.c.h.b16 %v203
    %v295 = vunpack.c.l.b16 %v204
    %v296 = vunpack.c.h.b16 %v204
    %v297 = vunpack.c.l.b16 %v205
    %v298 = vunpack.c.h.b16 %v205
    %v299 = vunpack.c.l.b16 %v206
    %v300 = vunpack.c.h.b16 %v206
    %v301 = vunpack.c.l.b16 %v207
    %v302 = vunpack.c.h.b16 %v207
    %v303 = vunpack.c.l.b16 %v208
    %v304 = vunpack.c.h.b16 %v208
    %v305 = vunpack.c.l.b16 %v209
    %v306 = vunpack.c.h.b16 %v209
    %v307 = vunpack.c.l.b16 %v210
    %v308 = vunpack.c.h.b16 %v210
    %v309 = vunpack.c.l.b16 %v211
    %v310 = vunpack.c.h.b16 %v211
    %v311 = vunpack.c.l.b16 %v212
    %v312 = vunpack.c.h.b16 %v212
    %v313 = vunpack.c.l.b16 %v213
    %v314 = vunpack.c.h.b16 %v213
    %v315 = vunpack.c.l.b16 %v214
    %v316 = vunpack.c.h.b16 %v214
    %v317 = vunpack.c.l.b16 %v215
    %v318 = vunpack.c.h.b16 %v215
    %v319 = vunpack.c.l.b16 %v216
    %v320 = vunpack.c.h.b16 %v216
    %v321 = vunpack.c.l.b16 %v217
    %v322 = vunpack.c.h.b16 %v217
    %v323 = vunpack.c.l.b16 %v218
    %v324 = vunpack.c.h.b16 %v218
    %v325 = vunpack.c.l.b16 %v219
    %v326 = vunpack.c.h.b16 %v219
    %v327 = vunpack.c.l.b16 %v220
    %v328 = vunpack.c.h.b16 %v220
    %v329 = vpack.c.b16 %v267, %v265
    %v330 = vpack.c.b16 %v268, %v266
    %v331 = vpack.c.b16 %v271, %v269
    %v332 = vpack.c.b16 %v272, %v270
    %v333 = vpack.c.b16 %v275, %v273
    %v334 = vpack.c.b16 %v276, %v274
    %v335 = vpack.c.b16 %v279, %v277
    %v336 = vpack.c.b16 %v280, %v278
    %v337 = vpack.c.b16 %v283, %v281
    %v338 = vpack.c.b16 %v284, %v282
    %v339 = vpack.c.b16 %v287, %v285
    %v340 = vpack.c.b16 %v288, %v286
    %v341 = vpack.c.b16 %v291, %v289
    %v342 = vpack.c.b16 %v292, %v290
    %v343 = vpack.c.b16 %v295, %v293
    %v344 = vpack.c.b16 %v296, %v294
    %v345 = vpack.c.b16 %v299, %v297
    %v346 = vpack.c.b16 %v300, %v298
    %v347 = vpack.c.b16 %v303, %v301
    %v348 = vpack.c.b16 %v304, %v302
    %v349 = vpack.c.b16 %v307, %v305
    %v350 = vpack.c.b16 %v308, %v306
    %v351 = vpack.c.b16 %v311, %v309
    %v352 = vpack.c.b16 %v312, %v310
    %v353 = vpack.c.b16 %v315, %v313
    %v354 = vpack.c.b16 %v316, %v314
    %v355 = vpack.c.b16 %v319, %v317
    %v356 = vpack.c.b16 %v320, %v318
    %v357 = vpack.c.b16 %v323, %v321
    %v358 = vpack.c.b16 %v324, %v322
    %v359 = vpack.c.b16 %v327, %v325
    %v360 = vpack.c.b16 %v328, %v326
    %393 = vmatprep.subr.bf16.mxu0 %v344
    %394 = vmatpush1.bf16.msra.mxu0 %v343
    %395 = vmatprep.subr.bf16.mxu0 %v342
    %396 = vmatpush1.bf16.msra.mxu0 %v341
    %397 = vmatprep.subr.bf16.mxu0 %v340
    %398 = vmatpush1.bf16.msra.mxu0 %v339
    %399 = vmatprep.subr.bf16.mxu0 %v338
    %400 = vmatpush1.bf16.msra.mxu0 %v337
    %401 = vmatprep.subr.bf16.mxu0 %v336
    %402 = vmatpush1.bf16.msra.mxu0 %v335
    %403 = vmatprep.subr.bf16.mxu0 %v334
    %404 = vmatpush1.bf16.msra.mxu0 %v333
    %405 = vmatprep.subr.bf16.mxu0 %v332
    %406 = vmatpush1.bf16.msra.mxu0 %v331
    %407 = vmatprep.subr.bf16.mxu0 %v330
    %408 = vmatpush1.bf16.msra.mxu0 %v329
    %409 = vmatprep.subr.bf16.mxu0 %v360
    %410 = vmatpush2.bf16.msra.mxu0 %v359
    %411 = vmatprep.subr.bf16.mxu0 %v358
    %412 = vmatpush2.bf16.msra.mxu0 %v357
    %413 = vmatprep.subr.bf16.mxu0 %v356
    %414 = vmatpush2.bf16.msra.mxu0 %v355
    %415 = vmatprep.subr.bf16.mxu0 %v354
    %416 = vmatpush2.bf16.msra.mxu0 %v353
    %417 = vmatprep.subr.bf16.mxu0 %v352
    %418 = vmatpush2.bf16.msra.mxu0 %v351
    %419 = vmatprep.subr.bf16.mxu0 %v350
    %420 = vmatpush2.bf16.msra.mxu0 %v349
    %421 = vmatprep.subr.bf16.mxu0 %v348
    %422 = vmatpush2.bf16.msra.mxu0 %v347
    %423 = vmatprep.subr.bf16.mxu0 %v346
    %424 = vmatpush2.bf16.msra.mxu0 %v345
    %425 = vmatprep.mubr.bf16.mxu0 %v188
    %426 = vmatmul.mubr.bf16.gmra.mxu0 %v187
    %v427 = vpop.f32.mrf.mxu0
    %v428 = vadd.f32 %v226, %v427
    %v429 = vpop.f32.mrf.mxu0
    %v430 = vadd.f32 %v230, %v429
    %v431 = vpop.f32.mrf.mxu0
    %v432 = vadd.f32 %v226, %v431
    %v433 = vpop.f32.mrf.mxu0
    %v434 = vadd.f32 %v230, %v433
    %435 = vdwg.mxu0
    %v436 = vmax.f32 %v428, 0.0
    %v437 = vmax.f32 %v430, 0.0
    %v438 = vmax.f32 %v432, 0.0
    %v439 = vmax.f32 %v434, 0.0
    %v440 = vpack.c.bf16 %v438, %v436
    %v441 = vpack.c.bf16 %v439, %v437
    %v442 = vld [vmem:[#allocation8] sm:$0xff]
    %v443 = vld [vmem:[#allocation8 + $0x8] sm:$0xff]
    %v444 = vld [vmem:[#allocation8 + $0x10] sm:$0xff]
    %v445 = vld [vmem:[#allocation8 + $0x18] sm:$0xff]
    %v446 = vld [vmem:[#allocation8 + $0x20] sm:$0xff]
    %v447 = vld [vmem:[#allocation8 + $0x28] sm:$0xff]
    %v448 = vld [vmem:[#allocation8 + $0x30] sm:$0xff]
    %v449 = vld [vmem:[#allocation8 + $0x38] sm:$0xff]
    %v450 = vld [vmem:[#allocation8 + $0x40] sm:$0xff]
    %v451 = vld [vmem:[#allocation8 + $0x48] sm:$0xff]
    %v452 = vld [vmem:[#allocation8 + $0x50] sm:$0xff]
    %v453 = vld [vmem:[#allocation8 + $0x58] sm:$0xff]
    %v454 = vld [vmem:[#allocation8 + $0x60] sm:$0xff]
    %v455 = vld [vmem:[#allocation8 + $0x68] sm:$0xff]
    %v456 = vld [vmem:[#allocation8 + $0x70] sm:$0xff]
    %v457 = vld [vmem:[#allocation8 + $0x78] sm:$0xff]
    %v458 = vld [vmem:[#allocation8 + $0x80] sm:$0xff]
    %v459 = vld [vmem:[#allocation8 + $0x88] sm:$0xff]
    %v460 = vld [vmem:[#allocation8 + $0x90] sm:$0xff]
    %v461 = vld [vmem:[#allocation8 + $0x98] sm:$0xff]
    %v462 = vld [vmem:[#allocation8 + $0xa0] sm:$0xff]
    %v463 = vld [vmem:[#allocation8 + $0xa8] sm:$0xff]
    %v464 = vld [vmem:[#allocation8 + $0xb0] sm:$0xff]
    %v465 = vld [vmem:[#allocation8 + $0xb8] sm:$0xff]
    %v466 = vld [vmem:[#allocation8 + $0xc0] sm:$0xff]
    %v467 = vld [vmem:[#allocation8 + $0xc8] sm:$0xff]
    %v468 = vld [vmem:[#allocation8 + $0xd0] sm:$0xff]
    %v469 = vld [vmem:[#allocation8 + $0xd8] sm:$0xff]
    %v470 = vld [vmem:[#allocation8 + $0xe0] sm:$0xff]
    %v471 = vld [vmem:[#allocation8 + $0xe8] sm:$0xff]
    %v472 = vld [vmem:[#allocation8 + $0xf0] sm:$0xff]
    %v473 = vld [vmem:[#allocation8 + $0xf8] sm:$0xff]
    %v474 = vld [vmem:[%s6] sm:$0x3]
    %v476 = vlaneseq
    %v477 = vshrl.u32 %v476, 7
    %v478 = vsub.s32 0, %v477
    %v479 = vrot.slane %v474, %v478
    %v480 = vlaneseq
    %v481 = vshrl.u32 %v480, 7
    %v482 = vsub.s32 1, %v481
    %v483 = vrot.slane %v474, %v482
    %v518 = vunpack.c.l.b16 %v442
    %v519 = vunpack.c.h.b16 %v442
    %v520 = vunpack.c.l.b16 %v443
    %v521 = vunpack.c.h.b16 %v443
    %v522 = vunpack.c.l.b16 %v444
    %v523 = vunpack.c.h.b16 %v444
    %v524 = vunpack.c.l.b16 %v445
    %v525 = vunpack.c.h.b16 %v445
    %v526 = vunpack.c.l.b16 %v446
    %v527 = vunpack.c.h.b16 %v446
    %v528 = vunpack.c.l.b16 %v447
    %v529 = vunpack.c.h.b16 %v447
    %v530 = vunpack.c.l.b16 %v448
    %v531 = vunpack.c.h.b16 %v448
    %v532 = vunpack.c.l.b16 %v449
    %v533 = vunpack.c.h.b16 %v449
    %v534 = vunpack.c.l.b16 %v450
    %v535 = vunpack.c.h.b16 %v450
    %v536 = vunpack.c.l.b16 %v451
    %v537 = vunpack.c.h.b16 %v451
    %v538 = vunpack.c.l.b16 %v452
    %v539 = vunpack.c.h.b16 %v452
    %v540 = vunpack.c.l.b16 %v453
    %v541 = vunpack.c.h.b16 %v453
    %v542 = vunpack.c.l.b16 %v454
    %v543 = vunpack.c.h.b16 %v454
    %v544 = vunpack.c.l.b16 %v455
    %v545 = vunpack.c.h.b16 %v455
    %v546 = vunpack.c.l.b16 %v456
    %v547 = vunpack.c.h.b16 %v456
    %v548 = vunpack.c.l.b16 %v457
    %v549 = vunpack.c.h.b16 %v457
    %v550 = vunpack.c.l.b16 %v458
    %v551 = vunpack.c.h.b16 %v458
    %v552 = vunpack.c.l.b16 %v459
    %v553 = vunpack.c.h.b16 %v459
    %v554 = vunpack.c.l.b16 %v460
    %v555 = vunpack.c.h.b16 %v460
    %v556 = vunpack.c.l.b16 %v461
    %v557 = vunpack.c.h.b16 %v461
    %v558 = vunpack.c.l.b16 %v462
    %v559 = vunpack.c.h.b16 %v462
    %v560 = vunpack.c.l.b16 %v463
    %v561 = vunpack.c.h.b16 %v463
    %v562 = vunpack.c.l.b16 %v464
    %v563 = vunpack.c.h.b16 %v464
    %v564 = vunpack.c.l.b16 %v465
    %v565 = vunpack.c.h.b16 %v465
    %v566 = vunpack.c.l.b16 %v466
    %v567 = vunpack.c.h.b16 %v466
    %v568 = vunpack.c.l.b16 %v467
    %v569 = vunpack.c.h.b16 %v467
    %v570 = vunpack.c.l.b16 %v468
    %v571 = vunpack.c.h.b16 %v468
    %v572 = vunpack.c.l.b16 %v469
    %v573 = vunpack.c.h.b16 %v469
    %v574 = vunpack.c.l.b16 %v470
    %v575 = vunpack.c.h.b16 %v470
    %v576 = vunpack.c.l.b16 %v471
    %v577 = vunpack.c.h.b16 %v471
    %v578 = vunpack.c.l.b16 %v472
    %v579 = vunpack.c.h.b16 %v472
    %v580 = vunpack.c.l.b16 %v473
    %v581 = vunpack.c.h.b16 %v473
    %v582 = vpack.c.b16 %v520, %v518
    %v583 = vpack.c.b16 %v521, %v519
    %v584 = vpack.c.b16 %v524, %v522
    %v585 = vpack.c.b16 %v525, %v523
    %v586 = vpack.c.b16 %v528, %v526
    %v587 = vpack.c.b16 %v529, %v527
    %v588 = vpack.c.b16 %v532, %v530
    %v589 = vpack.c.b16 %v533, %v531
    %v590 = vpack.c.b16 %v536, %v534
    %v591 = vpack.c.b16 %v537, %v535
    %v592 = vpack.c.b16 %v540, %v538
    %v593 = vpack.c.b16 %v541, %v539
    %v594 = vpack.c.b16 %v544, %v542
    %v595 = vpack.c.b16 %v545, %v543
    %v596 = vpack.c.b16 %v548, %v546
    %v597 = vpack.c.b16 %v549, %v547
    %v598 = vpack.c.b16 %v552, %v550
    %v599 = vpack.c.b16 %v553, %v551
    %v600 = vpack.c.b16 %v556, %v554
    %v601 = vpack.c.b16 %v557, %v555
    %v602 = vpack.c.b16 %v560, %v558
    %v603 = vpack.c.b16 %v561, %v559
    %v604 = vpack.c.b16 %v564, %v562
    %v605 = vpack.c.b16 %v565, %v563
    %v606 = vpack.c.b16 %v568, %v566
    %v607 = vpack.c.b16 %v569, %v567
    %v608 = vpack.c.b16 %v572, %v570
    %v609 = vpack.c.b16 %v573, %v571
    %v610 = vpack.c.b16 %v576, %v574
    %v611 = vpack.c.b16 %v577, %v575
    %v612 = vpack.c.b16 %v580, %v578
    %v613 = vpack.c.b16 %v581, %v579
    %646 = vmatprep.subr.bf16.mxu0 %v597
    %647 = vmatpush1.bf16.msra.mxu0 %v596
    %648 = vmatprep.subr.bf16.mxu0 %v595
    %649 = vmatpush1.bf16.msra.mxu0 %v594
    %650 = vmatprep.subr.bf16.mxu0 %v593
    %651 = vmatpush1.bf16.msra.mxu0 %v592
    %652 = vmatprep.subr.bf16.mxu0 %v591
    %653 = vmatpush1.bf16.msra.mxu0 %v590
    %654 = vmatprep.subr.bf16.mxu0 %v589
    %655 = vmatpush1.bf16.msra.mxu0 %v588
    %656 = vmatprep.subr.bf16.mxu0 %v587
    %657 = vmatpush1.bf16.msra.mxu0 %v586
    %658 = vmatprep.subr.bf16.mxu0 %v585
    %659 = vmatpush1.bf16.msra.mxu0 %v584
    %660 = vmatprep.subr.bf16.mxu0 %v583
    %661 = vmatpush1.bf16.msra.mxu0 %v582
    %662 = vmatprep.subr.bf16.mxu0 %v613
    %663 = vmatpush2.bf16.msra.mxu0 %v612
    %664 = vmatprep.subr.bf16.mxu0 %v611
    %665 = vmatpush2.bf16.msra.mxu0 %v610
    %666 = vmatprep.subr.bf16.mxu0 %v609
    %667 = vmatpush2.bf16.msra.mxu0 %v608
    %668 = vmatprep.subr.bf16.mxu0 %v607
    %669 = vmatpush2.bf16.msra.mxu0 %v606
    %670 = vmatprep.subr.bf16.mxu0 %v605
    %671 = vmatpush2.bf16.msra.mxu0 %v604
    %672 = vmatprep.subr.bf16.mxu0 %v603
    %673 = vmatpush2.bf16.msra.mxu0 %v602
    %674 = vmatprep.subr.bf16.mxu0 %v601
    %675 = vmatpush2.bf16.msra.mxu0 %v600
    %676 = vmatprep.subr.bf16.mxu0 %v599
    %677 = vmatpush2.bf16.msra.mxu0 %v598
    %678 = vmatprep.mubr.bf16.mxu0 %v441
    %679 = vmatmul.mubr.bf16.gmra.mxu0 %v440
    %v680 = vpop.f32.mrf.mxu0
    %v681 = vadd.f32 %v479, %v680
    %v682 = vpop.f32.mrf.mxu0
    %v683 = vadd.f32 %v483, %v682
    %v684 = vpop.f32.mrf.mxu0
    %v685 = vadd.f32 %v479, %v684
    %v686 = vpop.f32.mrf.mxu0
    %v687 = vadd.f32 %v483, %v686
    %688 = vdwg.mxu0
    %v689 = vmax.f32 %v681, 0.0
    %v690 = vmax.f32 %v683, 0.0
    %v691 = vmax.f32 %v685, 0.0
    %v692 = vmax.f32 %v687, 0.0
    %v693 = vpack.c.bf16 %v691, %v689
    %v694 = vpack.c.bf16 %v692, %v690
    %v695 = vld [vmem:[#allocation10] sm:$0xf]
    %v696 = vld [vmem:[#allocation10 + $0x4] sm:$0xf]
    %v697 = vld [vmem:[#allocation10 + $0x8] sm:$0xf]
    %v698 = vld [vmem:[#allocation10 + $0xc] sm:$0xf]
    %v699 = vld [vmem:[#allocation10 + $0x10] sm:$0xf]
    %v700 = vld [vmem:[#allocation10 + $0x14] sm:$0xf]
    %v701 = vld [vmem:[#allocation10 + $0x18] sm:$0xf]
    %v702 = vld [vmem:[#allocation10 + $0x1c] sm:$0xf]
    %v703 = vld [vmem:[#allocation10 + $0x20] sm:$0xf]
    %v704 = vld [vmem:[#allocation10 + $0x24] sm:$0xf]
    %v705 = vld [vmem:[#allocation10 + $0x28] sm:$0xf]
    %v706 = vld [vmem:[#allocation10 + $0x2c] sm:$0xf]
    %v707 = vld [vmem:[#allocation10 + $0x30] sm:$0xf]
    %v708 = vld [vmem:[#allocation10 + $0x34] sm:$0xf]
    %v709 = vld [vmem:[#allocation10 + $0x38] sm:$0xf]
    %v710 = vld [vmem:[#allocation10 + $0x3c] sm:$0xf]
    %v711 = vld [vmem:[#allocation10 + $0x40] sm:$0xf]
    %v712 = vld [vmem:[#allocation10 + $0x44] sm:$0xf]
    %v713 = vld [vmem:[#allocation10 + $0x48] sm:$0xf]
    %v714 = vld [vmem:[#allocation10 + $0x4c] sm:$0xf]
    %v715 = vld [vmem:[#allocation10 + $0x50] sm:$0xf]
    %v716 = vld [vmem:[#allocation10 + $0x54] sm:$0xf]
    %v717 = vld [vmem:[#allocation10 + $0x58] sm:$0xf]
    %v718 = vld [vmem:[#allocation10 + $0x5c] sm:$0xf]
    %v719 = vld [vmem:[#allocation10 + $0x60] sm:$0xf]
    %v720 = vld [vmem:[#allocation10 + $0x64] sm:$0xf]
    %v721 = vld [vmem:[#allocation10 + $0x68] sm:$0xf]
    %v722 = vld [vmem:[#allocation10 + $0x6c] sm:$0xf]
    %v723 = vld [vmem:[#allocation10 + $0x70] sm:$0xf]
    %v724 = vld [vmem:[#allocation10 + $0x74] sm:$0xf]
    %v725 = vld [vmem:[#allocation10 + $0x78] sm:$0xf]
    %v726 = vld [vmem:[#allocation10 + $0x7c] sm:$0xf]
    %v727 = vld [vmem:[%s9] sm:$0xf]
    %v728 = vld [vmem:[%s9 + $0x4] sm:$0xf]
    %v731 = vunpack.c.l.b16 %v727
    %v732 = vunpack.c.l.b16 %v728
    %v733 = vpack.c.b16 %v732, %v731
    %735 = vmatprep.subr.bf16.mxu0 0
    %736 = vmatpush1.bf16.msra.mxu0 0
    %737 = vmatprep.subr.bf16.mxu0 0
    %738 = vmatpush1.bf16.msra.mxu0 0
    %739 = vmatprep.subr.bf16.mxu0 0
    %740 = vmatpush1.bf16.msra.mxu0 0
    %741 = vmatprep.subr.bf16.mxu0 0
    %742 = vmatpush1.bf16.msra.mxu0 0
    %743 = vmatprep.subr.bf16.mxu0 0
    %744 = vmatpush1.bf16.msra.mxu0 0
    %745 = vmatprep.subr.bf16.mxu0 0
    %746 = vmatpush1.bf16.msra.mxu0 0
    %747 = vmatprep.subr.bf16.mxu0 0
    %748 = vmatpush1.bf16.msra.mxu0 0
    %749 = vmatprep.subr.bf16.mxu0 0
    %750 = vmatpush1.bf16.msra.mxu0 %v733
    %751 = vmatprep.subr.bf16.mxu0 0
    %752 = vmatpush2.bf16.msra.mxu0 0
    %753 = vmatprep.subr.bf16.mxu0 0
    %754 = vmatpush2.bf16.msra.mxu0 0
    %755 = vmatprep.subr.bf16.mxu0 0
    %756 = vmatpush2.bf16.msra.mxu0 0
    %757 = vmatprep.subr.bf16.mxu0 0
    %758 = vmatpush2.bf16.msra.mxu0 0
    %759 = vmatprep.subr.bf16.mxu0 0
    %760 = vmatpush2.bf16.msra.mxu0 0
    %761 = vmatprep.subr.bf16.mxu0 0
    %762 = vmatpush2.bf16.msra.mxu0 0
    %763 = vmatprep.subr.bf16.mxu0 0
    %764 = vmatpush2.bf16.msra.mxu0 0
    %765 = vmatprep.subr.bf16.mxu0 0
    %766 = vmatpush2.bf16.msra.mxu0 0
    %767 = vmatprep.mubr.bf16.mxu0 0
    %768 = vmatmul.mubr.bf16.gmra.mxu0 %v138
    %v769 = vpop.f32.mrf.mxu0
    %v770 = vadd.f32 0.0, %v769
    %v771 = vpop.f32.mrf.mxu0
    %v772 = vpop.f32.mrf.mxu0
    %v773 = vadd.f32 0.0, %v772
    %v774 = vpop.f32.mrf.mxu0
    %775 = vdwg.mxu0
    %v808 = vunpack.c.l.b16 %v695
    %v809 = vunpack.c.l.b16 %v696
    %v810 = vunpack.c.l.b16 %v697
    %v811 = vunpack.c.l.b16 %v698
    %v812 = vunpack.c.l.b16 %v699
    %v813 = vunpack.c.l.b16 %v700
    %v814 = vunpack.c.l.b16 %v701
    %v815 = vunpack.c.l.b16 %v702
    %v816 = vunpack.c.l.b16 %v703
    %v817 = vunpack.c.l.b16 %v704
    %v818 = vunpack.c.l.b16 %v705
    %v819 = vunpack.c.l.b16 %v706
    %v820 = vunpack.c.l.b16 %v707
    %v821 = vunpack.c.l.b16 %v708
    %v822 = vunpack.c.l.b16 %v709
    %v823 = vunpack.c.l.b16 %v710
    %v824 = vunpack.c.l.b16 %v711
    %v825 = vunpack.c.l.b16 %v712
    %v826 = vunpack.c.l.b16 %v713
    %v827 = vunpack.c.l.b16 %v714
    %v828 = vunpack.c.l.b16 %v715
    %v829 = vunpack.c.l.b16 %v716
    %v830 = vunpack.c.l.b16 %v717
    %v831 = vunpack.c.l.b16 %v718
    %v832 = vunpack.c.l.b16 %v719
    %v833 = vunpack.c.l.b16 %v720
    %v834 = vunpack.c.l.b16 %v721
    %v835 = vunpack.c.l.b16 %v722
    %v836 = vunpack.c.l.b16 %v723
    %v837 = vunpack.c.l.b16 %v724
    %v838 = vunpack.c.l.b16 %v725
    %v839 = vunpack.c.l.b16 %v726
    %v840 = vpack.c.b16 %v809, %v808
    %v841 = vpack.c.b16 %v811, %v810
    %v842 = vpack.c.b16 %v813, %v812
    %v843 = vpack.c.b16 %v815, %v814
    %v844 = vpack.c.b16 %v817, %v816
    %v845 = vpack.c.b16 %v819, %v818
    %v846 = vpack.c.b16 %v821, %v820
    %v847 = vpack.c.b16 %v823, %v822
    %v848 = vpack.c.b16 %v825, %v824
    %v849 = vpack.c.b16 %v827, %v826
    %v850 = vpack.c.b16 %v829, %v828
    %v851 = vpack.c.b16 %v831, %v830
    %v852 = vpack.c.b16 %v833, %v832
    %v853 = vpack.c.b16 %v835, %v834
    %v854 = vpack.c.b16 %v837, %v836
    %v855 = vpack.c.b16 %v839, %v838
    %872 = vmatprep.subr.bf16.mxu0 0
    %873 = vmatpush1.bf16.msra.mxu0 %v847
    %874 = vmatprep.subr.bf16.mxu0 0
    %875 = vmatpush1.bf16.msra.mxu0 %v846
    %876 = vmatprep.subr.bf16.mxu0 0
    %877 = vmatpush1.bf16.msra.mxu0 %v845
    %878 = vmatprep.subr.bf16.mxu0 0
    %879 = vmatpush1.bf16.msra.mxu0 %v844
    %880 = vmatprep.subr.bf16.mxu0 0
    %881 = vmatpush1.bf16.msra.mxu0 %v843
    %882 = vmatprep.subr.bf16.mxu0 0
    %883 = vmatpush1.bf16.msra.mxu0 %v842
    %884 = vmatprep.subr.bf16.mxu0 0
    %885 = vmatpush1.bf16.msra.mxu0 %v841
    %886 = vmatprep.subr.bf16.mxu0 0
    %887 = vmatpush1.bf16.msra.mxu0 %v840
    %888 = vmatprep.subr.bf16.mxu0 0
    %889 = vmatpush2.bf16.msra.mxu0 %v855
    %890 = vmatprep.subr.bf16.mxu0 0
    %891 = vmatpush2.bf16.msra.mxu0 %v854
    %892 = vmatprep.subr.bf16.mxu0 0
    %893 = vmatpush2.bf16.msra.mxu0 %v853
    %894 = vmatprep.subr.bf16.mxu0 0
    %895 = vmatpush2.bf16.msra.mxu0 %v852
    %896 = vmatprep.subr.bf16.mxu0 0
    %897 = vmatpush2.bf16.msra.mxu0 %v851
    %898 = vmatprep.subr.bf16.mxu0 0
    %899 = vmatpush2.bf16.msra.mxu0 %v850
    %900 = vmatprep.subr.bf16.mxu0 0
    %901 = vmatpush2.bf16.msra.mxu0 %v849
    %902 = vmatprep.subr.bf16.mxu0 0
    %903 = vmatpush2.bf16.msra.mxu0 %v848
    %904 = vmatprep.mubr.bf16.mxu0 %v694
    %905 = vmatmul.mubr.bf16.gmra.mxu0 %v693
    %v906 = vpop.f32.mrf.mxu0
    %v907 = vadd.f32 %v770, %v906
    %v908 = vpop.f32.mrf.mxu0
    %v909 = vpop.f32.mrf.mxu0
    %v910 = vadd.f32 %v773, %v909
    %v911 = vpop.f32.mrf.mxu0
    %912 = vdwg.mxu0
    %v913 = vld [vmem:[%s8] sm:$0x1]
    %v915 = vlaneseq
    %v916 = vshrl.u32 %v915, 7
    %v917 = vsub.s32 0, %v916
    %v918 = vrot.slane %v913, %v917
    %v920 = vadd.f32 %v907, %v918
    %v921 = vadd.f32 %v910, %v918
    %922 = vst [vmem:[#allocation11] sm:$0xff] %v920
    %923 = vst [vmem:[#allocation11 + $0x8] sm:$0xff] %v921
    // Predicated region
    $region62: #{tpu_custom_call.1} parent=1 // pred_check
      _
    $region63: #{tpu_custom_call.1} parent=1 // pred_check_branch
      %925 = sbr.rel (0) target = $region65
    $region64: #{tpu_custom_call.1} parent=1 // pred_region
      %s927 = ssub.s32 256, 256
      %928 = vsyncadd [#allocation4], %s927
      %s929 = sshll.u32 [#allocation11], 4
      %s930 = int_to_ptr.vmem [resolvable:$true] %s929
      %935 = dma.vmem_to_hbm [thread:$0]  %s930, 256, %s10, [#allocation4], 128, 128, 8
    $region65: #{tpu_custom_call.1} parent=1 // pred_fallthru
      _
    // Predicated region
    $region66: #{tpu_custom_call.1} parent=1 // pred_check
      _
    $region67: #{tpu_custom_call.1} parent=1 // pred_check_branch
      %937 = sbr.rel (0) target = $region69
    $region68: #{tpu_custom_call.1} parent=1 // pred_region
      %938 = dma.done [#allocation4], 256
    $region69: #{tpu_custom_call.1} parent=1 // pred_fallthru
      _
    %939 = vsyncpa [#allocation3], 1
    %940 = vsyncpa [#allocation6], 1
    %941 = vsyncpa [#allocation9], 1
    %942 = vsyncpa [#allocation4], 1

</llo_original>
